<compile_context>
chip_gen: v5e
topology: v5e:2x2
jax: 0.10.0
libtpu: 0.0.40
codegen_flags: <defaults>
</compile_context>

<pallas_src>
import functools

import jax
import jax.numpy as jnp
from jax.experimental import pallas as pl
from jax.experimental.pallas import tpu as pltpu


# ----------------------------------------------------------------------------
# Fused kernel: ensemble repeat (resident output) + edge_encoder MLP (E-tiled)
# ----------------------------------------------------------------------------
def _fused_kernel(r, x_ref, ea_ref, w1_ref, b1_ref, w2_ref, b2_ref,
                  rep_ref, y_ref):
    # --- ensemble repeat: rep[k*B + b] = x[b].  The repeat output block is
    #     resident across the whole grid (constant index_map) and written back
    #     to HBM exactly once, so we only fill it on the first grid step.
    @pl.when(pl.program_id(0) == 0)
    def _():
        x = x_ref[...]                                  # (B, C*H*W) lane-dense
        rep_ref[...] = jnp.concatenate([x] * r, axis=0)

    # --- edge_encoder tile: Linear(4,32) -> ReLU -> Linear(32,32)
    e = ea_ref[...].astype(jnp.float32)                 # (TILE_E, 4)
    w1 = w1_ref[...]                                    # (4, 32)
    te = e.shape[0]
    k_in = w1.shape[0]

    # K=4 first layer as rank-1 VPU FMAs (cheaper than a near-empty MXU pass).
    h = jnp.broadcast_to(b1_ref[...], (te, w1.shape[1]))
    for k in range(k_in):                               # static unroll, K=4
        h = h + e[:, k:k + 1] * w1[k:k + 1, :]
    h = jnp.maximum(h, 0.0)                             # ReLU on the VPU

    # 32x32 second layer on the MXU, f32 accumulation.
    y = jnp.dot(h, w2_ref[...], preferred_element_type=jnp.float32)
    y = y + b2_ref[...]
    y_ref[...] = y.astype(y_ref.dtype)


# ----------------------------------------------------------------------------
# HybridModel forward (rewiring branch, concrete parts only)
# ----------------------------------------------------------------------------
def hybrid_forward(params, data, labels, edge_attr, train=True,
                   train_ensemble=2, val_ensemble=2):
    r = train_ensemble if train else val_ensemble

    B = data.shape[0]
    chw = 1
    for d in data.shape[1:]:
        chw *= d
    data2d = data.reshape(B, chw)                       # lane-dense copy layout

    E, K = edge_attr.shape
    H1 = params["w1"].shape[1]
    H2 = params["w2"].shape[1]
    b1 = params["b1"].reshape(1, H1)                    # hoisted out of hot path
    b2 = params["b2"].reshape(1, H2)

    # E-tiling: full E if small, else 512-row tiles (multiple of 8).
    tile_e = E if E <= 512 else 512
    n_e = pl.cdiv(E, tile_e)

    itemsize = jnp.dtype(data.dtype).itemsize
    flops = E * (2 * K * H1 + 2 * H1 * H2)
    bytes_accessed = (data2d.size * itemsize * (1 + r)          # repeat in+out
                      + E * K * 4 + E * H2 * 4                  # edges in/out
                      + (K * H1 + H1 * H2 + H1 + H2) * 4)       # weights

    rep2d, edge_feats = pl.pallas_call(
        functools.partial(_fused_kernel, r),
        out_shape=(jax.ShapeDtypeStruct((r * B, chw), data.dtype),
                   jax.ShapeDtypeStruct((E, H2), jnp.float32)),
        grid=(n_e,),
        in_specs=[
            pl.BlockSpec((B, chw), lambda e: (0, 0)),           # data, resident
            pl.BlockSpec((tile_e, K), lambda e: (e, 0)),        # edges, E-tiled
            pl.BlockSpec((K, H1), lambda e: (0, 0)),            # w1, resident
            pl.BlockSpec((1, H1), lambda e: (0, 0)),            # b1, resident
            pl.BlockSpec((H1, H2), lambda e: (0, 0)),           # w2, resident
            pl.BlockSpec((1, H2), lambda e: (0, 0)),            # b2, resident
        ],
        out_specs=(
            pl.BlockSpec((r * B, chw), lambda e: (0, 0)),       # repeat, resident
            pl.BlockSpec((tile_e, H2), lambda e: (e, 0)),       # edge feats
        ),
        compiler_params=pltpu.CompilerParams(
            # repeat output is resident across the grid -> keep the axis
            # un-sharded for correctness (megacore would duplicate the buffer).
            dimension_semantics=("arbitrary",),
            vmem_limit_bytes=32 * 1024 * 1024,                  # fits v7x 64 MiB
        ),
        cost_estimate=pl.CostEstimate(flops=flops, transcendentals=0,
                                      bytes_accessed=bytes_accessed),
    )(data2d, edge_attr, params["w1"], b1, params["w2"], b2)

    repeated_data = rep2d.reshape((r * B,) + data.shape[1:])

    # repeated_labels = labels.repeat(r, 1)   (glue, negligible)
    repeated_labels = jnp.tile(labels, (r, 1))

    # TODO(synk): EdgeSelector -> GraphRewirer -> transform_pyg_batch ->
    #             Downstream scores are external undefined modules; the encoded
    #             edge features stand in for the upstream edge path.
    return edge_feats, repeated_data, repeated_labels


def init_params(key):
    """Deterministic init for the edge_encoder Linear(4,32) + Linear(32,32)."""
    k1, k2 = jax.random.split(key)
    w1 = jax.random.normal(k1, (4, 32), jnp.float32) * 0.1
    b1 = jnp.zeros((32,), jnp.float32)
    w2 = jax.random.normal(k2, (32, 32), jnp.float32) * 0.1
    b2 = jnp.zeros((32,), jnp.float32)
    return {"w1": w1, "b1": b1, "w2": w2, "b2": b2}


if __name__ == "__main__":
    key = jax.random.PRNGKey(0)
    kp, kd, kl, ke = jax.random.split(key, 4)

    params = init_params(kp)

    # small shapes consistent with the module (QM9-ish: image-like data tensor,
    # 4-dim edge attrs, scalar regression labels, hidden=32)
    B, C, Hh, Ww = 2, 4, 16, 16
    E = 64                                   # number of edge candidates
    R = 2                                    # train_ensemble
    data = jax.random.normal(kd, (B, C, Hh, Ww), jnp.float32)
    labels = jax.random.normal(kl, (B, 1), jnp.float32)
    edge_attr = jax.random.normal(ke, (E, 4), jnp.float32)

    edge_feats, rep_data, rep_labels = hybrid_forward(
        params, data, labels, edge_attr, train=True, train_ensemble=R)

    jax.block_until_ready((edge_feats, rep_data, rep_labels))

    # light sanity checks against pure-JAX reference
    ref_edge = jnp.maximum(edge_attr @ params["w1"] + params["b1"], 0.0) \
               @ params["w2"] + params["b2"]
    assert jnp.allclose(edge_feats, ref_edge, atol=1e-5)
    assert rep_data.shape == (R * B, C, Hh, Ww)
    assert jnp.allclose(rep_data[:B], data) and jnp.allclose(rep_data[B:], data)
    assert rep_labels.shape == (R * B, 1)

    print("KERNEL_OK")
</pallas_src>

<mosaic_0001>
module attributes {stable_mosaic.version = 11 : i64} {
  func.func @_fused_kernel(%arg0: i32, %arg1: memref<2x1024xf32, #tpu.memory_space<vmem>>, %arg2: memref<64x4xf32, #tpu.memory_space<vmem>>, %arg3: memref<4x32xf32, #tpu.memory_space<vmem>>, %arg4: memref<1x32xf32, #tpu.memory_space<vmem>>, %arg5: memref<32x32xf32, #tpu.memory_space<vmem>>, %arg6: memref<1x32xf32, #tpu.memory_space<vmem>>, %arg7: memref<4x1024xf32, #tpu.memory_space<vmem>>, %arg8: memref<64x32xf32, #tpu.memory_space<vmem>>) attributes {dimension_semantics = [#tpu.dimension_semantics<arbitrary>], iteration_bounds = array<i64: 1>, scalar_prefetch = 0 : i64, scratch_operands = 0 : i64, tpu.core_type = #tpu.core_type<tc>, window_params = [{pipeline_mode = #tpu.pipeline_mode<synchronous>, transform_indices = @transform_0, window_bounds = array<i64: 2, 1024>}, {transform_indices = @transform_1, window_bounds = array<i64: 64, 4>}, {pipeline_mode = #tpu.pipeline_mode<synchronous>, transform_indices = @transform_2, window_bounds = array<i64: 4, 32>}, {pipeline_mode = #tpu.pipeline_mode<synchronous>, transform_indices = @transform_3, window_bounds = array<i64: 1, 32>}, {pipeline_mode = #tpu.pipeline_mode<synchronous>, transform_indices = @transform_4, window_bounds = array<i64: 32, 32>}, {pipeline_mode = #tpu.pipeline_mode<synchronous>, transform_indices = @transform_5, window_bounds = array<i64: 1, 32>}, {pipeline_mode = #tpu.pipeline_mode<synchronous>, transform_indices = @transform_6, window_bounds = array<i64: 4, 1024>}, {transform_indices = @transform_7, window_bounds = array<i64: 64, 32>}]} {
    %c0_i32 = arith.constant 0 : i32
    %0 = arith.cmpi eq, %arg0, %c0_i32 : i32
    %1 = arith.extui %0 : i1 to i32
    %c0_i32_0 = arith.constant 0 : i32
    %2 = arith.cmpi ne, %1, %c0_i32_0 : i32
    scf.if %2 {
      %c0_13 = arith.constant 0 : index
      %c0_14 = arith.constant 0 : index
      %40 = vector.load %arg1[%c0_13, %c0_14] : memref<2x1024xf32, #tpu.memory_space<vmem>>, vector<2x1024xf32>
      %41 = tpu.concatenate %40, %40 in 0 : vector<2x1024xf32>, vector<2x1024xf32> -> vector<4x1024xf32>
      %c0_15 = arith.constant 0 : index
      %c0_16 = arith.constant 0 : index
      %42 = vector.load %arg7[%c0_15, %c0_16] : memref<4x1024xf32, #tpu.memory_space<vmem>>, vector<4x1024xf32>
      tpu.vector_store %arg7[%c0_15, %c0_16], %41 {strides = array<i32>} : memref<4x1024xf32, #tpu.memory_space<vmem>>, vector<4x1024xf32>,
    } else {
    }
    %c0 = arith.constant 0 : index
    %c0_1 = arith.constant 0 : index
    %3 = vector.load %arg2[%c0, %c0_1] : memref<64x4xf32, #tpu.memory_space<vmem>>, vector<64x4xf32>
    %c0_2 = arith.constant 0 : index
    %c0_3 = arith.constant 0 : index
    %4 = vector.load %arg3[%c0_2, %c0_3] : memref<4x32xf32, #tpu.memory_space<vmem>>, vector<4x32xf32>
    %c0_4 = arith.constant 0 : index
    %c0_5 = arith.constant 0 : index
    %5 = vector.load %arg4[%c0_4, %c0_5] : memref<1x32xf32, #tpu.memory_space<vmem>>, vector<1x32xf32>
    %6 = vector.shape_cast %5 : vector<1x32xf32> to vector<1x32xf32>
    %7 = vector.broadcast %6 : vector<1x32xf32> to vector<64x32xf32>
    %8 = vector.extract_strided_slice %3 {offsets = [0, 0], sizes = [64, 1], strides = [1, 1]} : vector<64x4xf32> to vector<64x1xf32>
    %9 = vector.extract_strided_slice %4 {offsets = [0, 0], sizes = [1, 32], strides = [1, 1]} : vector<4x32xf32> to vector<1x32xf32>
    %10 = vector.broadcast %8 : vector<64x1xf32> to vector<64x32xf32>
    %11 = vector.broadcast %9 : vector<1x32xf32> to vector<64x32xf32>
    %12 = arith.mulf %10, %11 : vector<64x32xf32>
    %13 = arith.addf %7, %12 : vector<64x32xf32>
    %14 = vector.extract_strided_slice %3 {offsets = [0, 1], sizes = [64, 1], strides = [1, 1]} : vector<64x4xf32> to vector<64x1xf32>
    %15 = vector.extract_strided_slice %4 {offsets = [1, 0], sizes = [1, 32], strides = [1, 1]} : vector<4x32xf32> to vector<1x32xf32>
    %16 = vector.broadcast %14 : vector<64x1xf32> to vector<64x32xf32>
    %17 = vector.broadcast %15 : vector<1x32xf32> to vector<64x32xf32>
    %18 = arith.mulf %16, %17 : vector<64x32xf32>
    %19 = arith.addf %13, %18 : vector<64x32xf32>
    %20 = vector.extract_strided_slice %3 {offsets = [0, 2], sizes = [64, 1], strides = [1, 1]} : vector<64x4xf32> to vector<64x1xf32>
    %21 = vector.extract_strided_slice %4 {offsets = [2, 0], sizes = [1, 32], strides = [1, 1]} : vector<4x32xf32> to vector<1x32xf32>
    %22 = vector.broadcast %20 : vector<64x1xf32> to vector<64x32xf32>
    %23 = vector.broadcast %21 : vector<1x32xf32> to vector<64x32xf32>
    %24 = arith.mulf %22, %23 : vector<64x32xf32>
    %25 = arith.addf %19, %24 : vector<64x32xf32>
    %26 = vector.extract_strided_slice %3 {offsets = [0, 3], sizes = [64, 1], strides = [1, 1]} : vector<64x4xf32> to vector<64x1xf32>
    %27 = vector.extract_strided_slice %4 {offsets = [3, 0], sizes = [1, 32], strides = [1, 1]} : vector<4x32xf32> to vector<1x32xf32>
    %28 = vector.broadcast %26 : vector<64x1xf32> to vector<64x32xf32>
    %29 = vector.broadcast %27 : vector<1x32xf32> to vector<64x32xf32>
    %30 = arith.mulf %28, %29 : vector<64x32xf32>
    %31 = arith.addf %25, %30 : vector<64x32xf32>
    %cst = arith.constant 0.000000e+00 : f32
    %32 = vector.broadcast %cst : f32 to vector<64x32xf32>
    %33 = arith.maximumf %31, %32 : vector<64x32xf32>
    %c0_6 = arith.constant 0 : index
    %c0_7 = arith.constant 0 : index
    %34 = vector.load %arg5[%c0_6, %c0_7] : memref<32x32xf32, #tpu.memory_space<vmem>>, vector<32x32xf32>
    %cst_8 = arith.constant dense<0.000000e+00> : vector<64x32xf32>
    %35 = tpu.matmul %33, %34, %cst_8 {dimension_numbers = #tpu.dot_dimension_numbers<[1], [0], [0], [1], [0, 0, 1, 1], [], []>} : vector<64x32xf32>, vector<32x32xf32>, vector<64x32xf32> -> vector<64x32xf32>
    %c0_9 = arith.constant 0 : index
    %c0_10 = arith.constant 0 : index
    %36 = vector.load %arg6[%c0_9, %c0_10] : memref<1x32xf32, #tpu.memory_space<vmem>>, vector<1x32xf32>
    %37 = vector.broadcast %36 : vector<1x32xf32> to vector<64x32xf32>
    %38 = arith.addf %35, %37 : vector<64x32xf32>
    %c0_11 = arith.constant 0 : index
    %c0_12 = arith.constant 0 : index
    %39 = vector.load %arg8[%c0_11, %c0_12] : memref<64x32xf32, #tpu.memory_space<vmem>>, vector<64x32xf32>
    tpu.vector_store %arg8[%c0_11, %c0_12], %38 {strides = array<i32>} : memref<64x32xf32, #tpu.memory_space<vmem>>, vector<64x32xf32>,
    return
  }
  func.func @transform_0(%arg0: i32) -> (i32, i32) {
    %c0_i32 = arith.constant 0 : i32
    %c0_i32_0 = arith.constant 0 : i32
    %c0_i32_1 = arith.constant 0 : i32
    return %c0_i32, %c0_i32_0 : i32, i32
  }
  func.func @transform_1(%arg0: i32) -> (i32, i32) {
    %c0_i32 = arith.constant 0 : i32
    %c0_i32_0 = arith.constant 0 : i32
    return %arg0, %c0_i32 : i32, i32
  }
  func.func @transform_2(%arg0: i32) -> (i32, i32) {
    %c0_i32 = arith.constant 0 : i32
    %c0_i32_0 = arith.constant 0 : i32
    %c0_i32_1 = arith.constant 0 : i32
    return %c0_i32, %c0_i32_0 : i32, i32
  }
  func.func @transform_3(%arg0: i32) -> (i32, i32) {
    %c0_i32 = arith.constant 0 : i32
    %c0_i32_0 = arith.constant 0 : i32
    %c0_i32_1 = arith.constant 0 : i32
    return %c0_i32, %c0_i32_0 : i32, i32
  }
  func.func @transform_4(%arg0: i32) -> (i32, i32) {
    %c0_i32 = arith.constant 0 : i32
    %c0_i32_0 = arith.constant 0 : i32
    %c0_i32_1 = arith.constant 0 : i32
    return %c0_i32, %c0_i32_0 : i32, i32
  }
  func.func @transform_5(%arg0: i32) -> (i32, i32) {
    %c0_i32 = arith.constant 0 : i32
    %c0_i32_0 = arith.constant 0 : i32
    %c0_i32_1 = arith.constant 0 : i32
    return %c0_i32, %c0_i32_0 : i32, i32
  }
  func.func @transform_6(%arg0: i32) -> (i32, i32) {
    %c0_i32 = arith.constant 0 : i32
    %c0_i32_0 = arith.constant 0 : i32
    %c0_i32_1 = arith.constant 0 : i32
    return %c0_i32, %c0_i32_0 : i32, i32
  }
  func.func @transform_7(%arg0: i32) -> (i32, i32) {
    %c0_i32 = arith.constant 0 : i32
    %c0_i32_0 = arith.constant 0 : i32
    return %arg0, %c0_i32 : i32, i32
  }
}

</mosaic_0001>

<llo_original>
// kernel: tpu_custom_call.1
$region0: #{tpu_custom_call.1}
  #allocation0 [shape = 'u32[]', space=smem, size = 0x4, offset = 0x4, fixed_abs, tag = 'smem constant byte address 0x4 - core index']
  #allocation1 [shape = 'u32[72,128]{1,0:T(1,128)}', space=vmem, size = 0x9000, scoped, tag = 'internal scratch']
  %s0 = inlined_call_operand.vmem [shape: f32[2,1024], index: 0, kind: input, shape index: {}]
  %s1 = inlined_call_operand.vmem [shape: f32[64,4], index: 1, kind: input, shape index: {}]
  %s2 = inlined_call_operand.vmem [shape: f32[4,32], index: 2, kind: input, shape index: {}]
  %s3 = inlined_call_operand.vmem [shape: f32[1,32], index: 3, kind: input, shape index: {}]
  %s4 = inlined_call_operand.vmem [shape: f32[32,32], index: 4, kind: input, shape index: {}]
  %s5 = inlined_call_operand.vmem [shape: f32[1,32], index: 5, kind: input, shape index: {}]
  %s6 = inlined_call_operand.hbm [shape: f32[4,1024], index: 6, kind: output, shape index: {0}]
  %s7 = inlined_call_operand.vmem [shape: f32[64,32], index: 7, kind: output, shape index: {1}]
  %8 = xla_tuple %s6, %s7
  %s9 = sld [smem:[#allocation0]]
  $region46: #{tpu_custom_call.1} parent=0
    _
  %s11 = ssub.s32 1, %s9
  %s12 = scalar_select 0, %s11, %s9
  $region1: #{tpu_custom_call.1} parent=0
    #allocation2 [shape = 'u8[16384]{0}', space=vmem, size = 0x4000, scoped, tag = 'output window, operand 0, single buffered']
    #allocation3 [shape = 's32[1]{0}', space=sflag, size = 0x4, scoped, tag = 'scoped memory for tpu_custom_call.1']
    %13 = vsyncpa [#allocation3], 0
    // Predicated region
    $region2: #{tpu_custom_call.1} parent=1 // pred_check
      _
    $region3: #{tpu_custom_call.1} parent=1 // pred_check_branch
      %15 = sbr.rel (0) target = $region5
    $region4: #{tpu_custom_call.1} parent=1 // pred_region
      _
    $region5: #{tpu_custom_call.1} parent=1 // pred_fallthru
      _
    // Predicated region
    $region6: #{tpu_custom_call.1} parent=1 // pred_check
      _
    $region7: #{tpu_custom_call.1} parent=1 // pred_check_branch
      %17 = sbr.rel (0) target = $region9
    $region8: #{tpu_custom_call.1} parent=1 // pred_region
      _
    $region9: #{tpu_custom_call.1} parent=1 // pred_fallthru
      _
    // Predicated region
    $region10: #{tpu_custom_call.1} parent=1 // pred_check
      _
    $region11: #{tpu_custom_call.1} parent=1 // pred_check_branch
      %19 = sbr.rel (0) target = $region13
    $region12: #{tpu_custom_call.1} parent=1 // pred_region
      _
    $region13: #{tpu_custom_call.1} parent=1 // pred_fallthru
      _
    // Predicated region
    $region14: #{tpu_custom_call.1} parent=1 // pred_check
      _
    $region15: #{tpu_custom_call.1} parent=1 // pred_check_branch
      %21 = sbr.rel (0) target = $region17
    $region16: #{tpu_custom_call.1} parent=1 // pred_region
      _
    $region17: #{tpu_custom_call.1} parent=1 // pred_fallthru
      _
    // Predicated region
    $region18: #{tpu_custom_call.1} parent=1 // pred_check
      _
    $region19: #{tpu_custom_call.1} parent=1 // pred_check_branch
      %23 = sbr.rel (0) target = $region21
    $region20: #{tpu_custom_call.1} parent=1 // pred_region
      _
    $region21: #{tpu_custom_call.1} parent=1 // pred_fallthru
      _
    // Predicated region
    $region22: #{tpu_custom_call.1} parent=1 // pred_check
      _
    $region23: #{tpu_custom_call.1} parent=1 // pred_check_branch
      %25 = sbr.rel (0) target = $region25
    $region24: #{tpu_custom_call.1} parent=1 // pred_region
      _
    $region25: #{tpu_custom_call.1} parent=1 // pred_fallthru
      _
    %p26 = scmp.eq.s32.totalorder 0, 0
    // Predicated region
    $region26: #{tpu_custom_call.1} parent=1 // pred_check
      %p27 = pneg %p26
    $region27: #{tpu_custom_call.1} parent=1 // pred_check_branch
      %29 = sbr.rel (%p27) target = $region29
    $region28: #{tpu_custom_call.1} parent=1 // pred_region
      %v30 = vld [vmem:[%s0] sm:$0xff]
      %v31 = vld [vmem:[%s0 + $0x8] sm:$0xff]
      %34 = vst [vmem:[#allocation1] ss:$4 sm:$0xff] %v30
      %s35 = scalar_lea.vmem [#allocation1], 32
      %36 = vst [vmem:[%s35] ss:$4 sm:$0xff] %v31
      %v37 = vld.sshfl [vmem:[#allocation1] sm:$0xff pattern:$0x73625140]
      %v38 = vld.sshfl [vmem:[#allocation1 + $0x8] sm:$0xff pattern:$0x73625140]
      %v39 = vld.sshfl [vmem:[#allocation1 + $0x10] sm:$0xff pattern:$0x73625140]
      %v40 = vld.sshfl [vmem:[#allocation1 + $0x18] sm:$0xff pattern:$0x73625140]
      %v41 = vld.sshfl [vmem:[#allocation1 + $0x20] sm:$0xff pattern:$0x73625140]
      %v42 = vld.sshfl [vmem:[#allocation1 + $0x28] sm:$0xff pattern:$0x73625140]
      %v43 = vld.sshfl [vmem:[#allocation1 + $0x30] sm:$0xff pattern:$0x73625140]
      %v44 = vld.sshfl [vmem:[#allocation1 + $0x38] sm:$0xff pattern:$0x73625140]
      %s53 = scalar_lea.vmem [#allocation1], 1
      %54 = vst [vmem:[%s53] ss:$4 sm:$0xff] %v30
      %s55 = scalar_lea.vmem [#allocation1], 33
      %56 = vst [vmem:[%s55] ss:$4 sm:$0xff] %v31
      %v57 = vld.sshfl [vmem:[#allocation1] sm:$0xff pattern:$0x73625140]
      %v58 = vld.sshfl [vmem:[#allocation1 + $0x8] sm:$0xff pattern:$0x73625140]
      %v59 = vld.sshfl [vmem:[#allocation1 + $0x10] sm:$0xff pattern:$0x73625140]
      %v60 = vld.sshfl [vmem:[#allocation1 + $0x18] sm:$0xff pattern:$0x73625140]
      %v61 = vld.sshfl [vmem:[#allocation1 + $0x20] sm:$0xff pattern:$0x73625140]
      %v62 = vld.sshfl [vmem:[#allocation1 + $0x28] sm:$0xff pattern:$0x73625140]
      %v63 = vld.sshfl [vmem:[#allocation1 + $0x30] sm:$0xff pattern:$0x73625140]
      %v64 = vld.sshfl [vmem:[#allocation1 + $0x38] sm:$0xff pattern:$0x73625140]
      %vm73 = vcmask 1041408
      %v74 = vsel %vm73, %v37, %v57
      %v75 = vsel %vm73, %v38, %v58
      %v76 = vsel %vm73, %v39, %v59
      %v77 = vsel %vm73, %v40, %v60
      %v78 = vsel %vm73, %v41, %v61
      %v79 = vsel %vm73, %v42, %v62
      %v80 = vsel %vm73, %v43, %v63
      %v81 = vsel %vm73, %v44, %v64
      %v90 = vrot.slane %v75, 4
      %v91 = vrot.slane %v77, 4
      %v92 = vrot.slane %v79, 4
      %v93 = vrot.slane %v81, 4
      %vm94 = vcmask 1043456
      %v95 = vsel %vm94, %v74, %v90
      %v96 = vsel %vm94, %v76, %v91
      %v97 = vsel %vm94, %v78, %v92
      %v98 = vsel %vm94, %v80, %v93
      %103 = vst [vmem:[#allocation2] sm:$0xff] %v95
      %104 = vst [vmem:[#allocation2 + $0x8] sm:$0xff] %v96
      %105 = vst [vmem:[#allocation2 + $0x10] sm:$0xff] %v97
      %106 = vst [vmem:[#allocation2 + $0x18] sm:$0xff] %v98
    $region29: #{tpu_custom_call.1} parent=1 // pred_fallthru
      _
    %v107 = vld [vmem:[%s1] sm:$0xff]
    %v108 = vld [vmem:[%s1 + $0x8] sm:$0xff]
    %v109 = vld [vmem:[%s1 + $0x10] sm:$0xff]
    %v110 = vld [vmem:[%s1 + $0x18] sm:$0xff]
    %v111 = vld [vmem:[%s1 + $0x20] sm:$0xff]
    %v112 = vld [vmem:[%s1 + $0x28] sm:$0xff]
    %v113 = vld [vmem:[%s1 + $0x30] sm:$0xff]
    %v114 = vld [vmem:[%s1 + $0x38] sm:$0xff]
    %v115 = vld [vmem:[%s2] sm:$0xf]
    %v116 = vld [vmem:[%s3] sm:$0x1]
    %v118 = vperm.slane %v116, 0
    %121 = vset.pattern.permute.xlu0 0
    %122 = vperm.xlu0 %121, %v107
    %v123 = vpop.permute.xlu0 %122
    %126 = vset.pattern.permute.xlu0 0
    %127 = vperm.xlu0 %126, %v108
    %v128 = vpop.permute.xlu0 %127
    %131 = vset.pattern.permute.xlu0 0
    %132 = vperm.xlu0 %131, %v109
    %v133 = vpop.permute.xlu0 %132
    %136 = vset.pattern.permute.xlu0 0
    %137 = vperm.xlu0 %136, %v110
    %v138 = vpop.permute.xlu0 %137
    %141 = vset.pattern.permute.xlu0 0
    %142 = vperm.xlu0 %141, %v111
    %v143 = vpop.permute.xlu0 %142
    %146 = vset.pattern.permute.xlu0 0
    %147 = vperm.xlu0 %146, %v112
    %v148 = vpop.permute.xlu0 %147
    %151 = vset.pattern.permute.xlu0 0
    %152 = vperm.xlu0 %151, %v113
    %v153 = vpop.permute.xlu0 %152
    %156 = vset.pattern.permute.xlu0 0
    %157 = vperm.xlu0 %156, %v114
    %v158 = vpop.permute.xlu0 %157
    %v160 = vperm.slane %v115, 0
    %v161 = vmul.f32 %v123, %v160
    %v162 = vmul.f32 %v128, %v160
    %v163 = vmul.f32 %v133, %v160
    %v164 = vmul.f32 %v138, %v160
    %v165 = vmul.f32 %v143, %v160
    %v166 = vmul.f32 %v148, %v160
    %v167 = vmul.f32 %v153, %v160
    %v168 = vmul.f32 %v158, %v160
    %v169 = vadd.f32 %v118, %v161
    %v170 = vadd.f32 %v118, %v162
    %v171 = vadd.f32 %v118, %v163
    %v172 = vadd.f32 %v118, %v164
    %v173 = vadd.f32 %v118, %v165
    %v174 = vadd.f32 %v118, %v166
    %v175 = vadd.f32 %v118, %v167
    %v176 = vadd.f32 %v118, %v168
    %177 = vset.pattern.permute.xlu0 1
    %178 = vperm.xlu0 %177, %v107
    %v179 = vpop.permute.xlu0 %178
    %181 = vset.pattern.permute.xlu0 1
    %182 = vperm.xlu0 %181, %v108
    %v183 = vpop.permute.xlu0 %182
    %185 = vset.pattern.permute.xlu0 1
    %186 = vperm.xlu0 %185, %v109
    %v187 = vpop.permute.xlu0 %186
    %189 = vset.pattern.permute.xlu0 1
    %190 = vperm.xlu0 %189, %v110
    %v191 = vpop.permute.xlu0 %190
    %193 = vset.pattern.permute.xlu0 1
    %194 = vperm.xlu0 %193, %v111
    %v195 = vpop.permute.xlu0 %194
    %197 = vset.pattern.permute.xlu0 1
    %198 = vperm.xlu0 %197, %v112
    %v199 = vpop.permute.xlu0 %198
    %201 = vset.pattern.permute.xlu0 1
    %202 = vperm.xlu0 %201, %v113
    %v203 = vpop.permute.xlu0 %202
    %205 = vset.pattern.permute.xlu0 1
    %206 = vperm.xlu0 %205, %v114
    %v207 = vpop.permute.xlu0 %206
    %v209 = vperm.slane %v115, 1
    %v210 = vmul.f32 %v179, %v209
    %v211 = vmul.f32 %v183, %v209
    %v212 = vmul.f32 %v187, %v209
    %v213 = vmul.f32 %v191, %v209
    %v214 = vmul.f32 %v195, %v209
    %v215 = vmul.f32 %v199, %v209
    %v216 = vmul.f32 %v203, %v209
    %v217 = vmul.f32 %v207, %v209
    %v218 = vadd.f32 %v169, %v210
    %v219 = vadd.f32 %v170, %v211
    %v220 = vadd.f32 %v171, %v212
    %v221 = vadd.f32 %v172, %v213
    %v222 = vadd.f32 %v173, %v214
    %v223 = vadd.f32 %v174, %v215
    %v224 = vadd.f32 %v175, %v216
    %v225 = vadd.f32 %v176, %v217
    %226 = vset.pattern.permute.xlu0 2
    %227 = vperm.xlu0 %226, %v107
    %v228 = vpop.permute.xlu0 %227
    %230 = vset.pattern.permute.xlu0 2
    %231 = vperm.xlu0 %230, %v108
    %v232 = vpop.permute.xlu0 %231
    %234 = vset.pattern.permute.xlu0 2
    %235 = vperm.xlu0 %234, %v109
    %v236 = vpop.permute.xlu0 %235
    %238 = vset.pattern.permute.xlu0 2
    %239 = vperm.xlu0 %238, %v110
    %v240 = vpop.permute.xlu0 %239
    %242 = vset.pattern.permute.xlu0 2
    %243 = vperm.xlu0 %242, %v111
    %v244 = vpop.permute.xlu0 %243
    %246 = vset.pattern.permute.xlu0 2
    %247 = vperm.xlu0 %246, %v112
    %v248 = vpop.permute.xlu0 %247
    %250 = vset.pattern.permute.xlu0 2
    %251 = vperm.xlu0 %250, %v113
    %v252 = vpop.permute.xlu0 %251
    %254 = vset.pattern.permute.xlu0 2
    %255 = vperm.xlu0 %254, %v114
    %v256 = vpop.permute.xlu0 %255
    %v258 = vperm.slane %v115, 2
    %v259 = vmul.f32 %v228, %v258
    %v260 = vmul.f32 %v232, %v258
    %v261 = vmul.f32 %v236, %v258
    %v262 = vmul.f32 %v240, %v258
    %v263 = vmul.f32 %v244, %v258
    %v264 = vmul.f32 %v248, %v258
    %v265 = vmul.f32 %v252, %v258
    %v266 = vmul.f32 %v256, %v258
    %v267 = vadd.f32 %v218, %v259
    %v268 = vadd.f32 %v219, %v260
    %v269 = vadd.f32 %v220, %v261
    %v270 = vadd.f32 %v221, %v262
    %v271 = vadd.f32 %v222, %v263
    %v272 = vadd.f32 %v223, %v264
    %v273 = vadd.f32 %v224, %v265
    %v274 = vadd.f32 %v225, %v266
    %275 = vset.pattern.permute.xlu0 3
    %276 = vperm.xlu0 %275, %v107
    %v277 = vpop.permute.xlu0 %276
    %279 = vset.pattern.permute.xlu0 3
    %280 = vperm.xlu0 %279, %v108
    %v281 = vpop.permute.xlu0 %280
    %283 = vset.pattern.permute.xlu0 3
    %284 = vperm.xlu0 %283, %v109
    %v285 = vpop.permute.xlu0 %284
    %287 = vset.pattern.permute.xlu0 3
    %288 = vperm.xlu0 %287, %v110
    %v289 = vpop.permute.xlu0 %288
    %291 = vset.pattern.permute.xlu0 3
    %292 = vperm.xlu0 %291, %v111
    %v293 = vpop.permute.xlu0 %292
    %295 = vset.pattern.permute.xlu0 3
    %296 = vperm.xlu0 %295, %v112
    %v297 = vpop.permute.xlu0 %296
    %299 = vset.pattern.permute.xlu0 3
    %300 = vperm.xlu0 %299, %v113
    %v301 = vpop.permute.xlu0 %300
    %303 = vset.pattern.permute.xlu0 3
    %304 = vperm.xlu0 %303, %v114
    %v305 = vpop.permute.xlu0 %304
    %v307 = vperm.slane %v115, 3
    %v308 = vmul.f32 %v277, %v307
    %v309 = vmul.f32 %v281, %v307
    %v310 = vmul.f32 %v285, %v307
    %v311 = vmul.f32 %v289, %v307
    %v312 = vmul.f32 %v293, %v307
    %v313 = vmul.f32 %v297, %v307
    %v314 = vmul.f32 %v301, %v307
    %v315 = vmul.f32 %v305, %v307
    %v316 = vadd.f32 %v267, %v308
    %v317 = vadd.f32 %v268, %v309
    %v318 = vadd.f32 %v269, %v310
    %v319 = vadd.f32 %v270, %v311
    %v320 = vadd.f32 %v271, %v312
    %v321 = vadd.f32 %v272, %v313
    %v322 = vadd.f32 %v273, %v314
    %v323 = vadd.f32 %v274, %v315
    %v324 = vmax.f32 %v316, 0.0
    %v325 = vmax.f32 %v317, 0.0
    %v326 = vmax.f32 %v318, 0.0
    %v327 = vmax.f32 %v319, 0.0
    %v328 = vmax.f32 %v320, 0.0
    %v329 = vmax.f32 %v321, 0.0
    %v330 = vmax.f32 %v322, 0.0
    %v331 = vmax.f32 %v323, 0.0
    %v332 = vld [vmem:[%s4] sm:$0xff]
    %v333 = vld [vmem:[%s4 + $0x8] sm:$0xff]
    %v334 = vld [vmem:[%s4 + $0x10] sm:$0xff]
    %v335 = vld [vmem:[%s4 + $0x18] sm:$0xff]
    %v336 = vld [vmem:[%s5] sm:$0x1]
    %v338 = vperm.slane %v336, 0
    %vm340 = vcmask 261120
    %v342 = vsel %vm340, %v324, 0
    %v345 = vsel %vm340, %v325, 0
    %v348 = vsel %vm340, %v326, 0
    %v351 = vsel %vm340, %v327, 0
    %v354 = vsel %vm340, %v328, 0
    %v357 = vsel %vm340, %v329, 0
    %v360 = vsel %vm340, %v330, 0
    %v363 = vsel %vm340, %v331, 0
    %365 = vmatpush.msra.mxu0 0.0
    %366 = vmatpush.msra.mxu0 0.0
    %367 = vmatpush.msra.mxu0 0.0
    %368 = vmatpush.msra.mxu0 0.0
    %369 = vmatpush.msra.mxu0 0.0
    %370 = vmatpush.msra.mxu0 0.0
    %371 = vmatpush.msra.mxu0 0.0
    %372 = vmatpush.msra.mxu0 0.0
    %373 = vmatpush.msra.mxu0 0.0
    %374 = vmatpush.msra.mxu0 0.0
    %375 = vmatpush.msra.mxu0 0.0
    %376 = vmatpush.msra.mxu0 0.0
    %377 = vmatpush.msra.mxu0 %v335
    %378 = vmatpush.msra.mxu0 %v334
    %379 = vmatpush.msra.mxu0 %v333
    %380 = vmatpush.msra.mxu0 %v332
    %381 = vmatmul.f32.gmra.mxu0 %v342
    %v382 = vpop.f32.mrf.mxu0
    %v383 = vadd.f32 %v338, %v382
    %384 = vmatmul.f32.gmra.mxu0 %v345
    %v385 = vpop.f32.mrf.mxu0
    %v386 = vadd.f32 %v338, %v385
    %387 = vmatmul.f32.gmra.mxu0 %v348
    %v388 = vpop.f32.mrf.mxu0
    %v389 = vadd.f32 %v338, %v388
    %390 = vmatmul.f32.gmra.mxu0 %v351
    %v391 = vpop.f32.mrf.mxu0
    %v392 = vadd.f32 %v338, %v391
    %393 = vmatmul.f32.gmra.mxu0 %v354
    %v394 = vpop.f32.mrf.mxu0
    %v395 = vadd.f32 %v338, %v394
    %396 = vmatmul.f32.gmra.mxu0 %v357
    %v397 = vpop.f32.mrf.mxu0
    %v398 = vadd.f32 %v338, %v397
    %399 = vmatmul.f32.gmra.mxu0 %v360
    %v400 = vpop.f32.mrf.mxu0
    %v401 = vadd.f32 %v338, %v400
    %402 = vmatmul.f32.gmra.mxu0 %v363
    %v403 = vpop.f32.mrf.mxu0
    %v404 = vadd.f32 %v338, %v403
    %405 = vdwg.mxu0
    %406 = vst.msk [vmem:[%s7] sm:$0xff] %vm340, %v383
    %407 = vst.msk [vmem:[%s7 + $0x8] sm:$0xff] %vm340, %v386
    %408 = vst.msk [vmem:[%s7 + $0x10] sm:$0xff] %vm340, %v389
    %409 = vst.msk [vmem:[%s7 + $0x18] sm:$0xff] %vm340, %v392
    %410 = vst.msk [vmem:[%s7 + $0x20] sm:$0xff] %vm340, %v395
    %411 = vst.msk [vmem:[%s7 + $0x28] sm:$0xff] %vm340, %v398
    %412 = vst.msk [vmem:[%s7 + $0x30] sm:$0xff] %vm340, %v401
    %413 = vst.msk [vmem:[%s7 + $0x38] sm:$0xff] %vm340, %v404
    // Predicated region
    $region30: #{tpu_custom_call.1} parent=1 // pred_check
      _
    $region31: #{tpu_custom_call.1} parent=1 // pred_check_branch
      %415 = sbr.rel (0) target = $region33
    $region32: #{tpu_custom_call.1} parent=1 // pred_region
      %417 = vsyncadd [#allocation3], 0
      %s419 = sshll.u32 [#allocation2], 4
      %s420 = int_to_ptr.vmem [resolvable:$true] %s419
      %s421 = sshll.u32 %s6, 4
      %s422 = int_to_ptr.hbm [resolvable:$true] %s421
      %424 = dma.vmem_to_hbm [thread:$0]  %s420, 512, %s422, [#allocation3]
    $region33: #{tpu_custom_call.1} parent=1 // pred_fallthru
      _
    // Predicated region
    $region34: #{tpu_custom_call.1} parent=1 // pred_check
      _
    $region35: #{tpu_custom_call.1} parent=1 // pred_check_branch
      %426 = sbr.rel (0) target = $region37
    $region36: #{tpu_custom_call.1} parent=1 // pred_region
      _
    $region37: #{tpu_custom_call.1} parent=1 // pred_fallthru
      _
    // Predicated region
    $region38: #{tpu_custom_call.1} parent=1 // pred_check
      _
    $region39: #{tpu_custom_call.1} parent=1 // pred_check_branch
      %428 = sbr.rel (0) target = $region41
    $region40: #{tpu_custom_call.1} parent=1 // pred_region
      %430 = dma.done [#allocation3], 512
    $region41: #{tpu_custom_call.1} parent=1 // pred_fallthru
      _
    // Predicated region
    $region42: #{tpu_custom_call.1} parent=1 // pred_check
      _
    $region43: #{tpu_custom_call.1} parent=1 // pred_check_branch
      %432 = sbr.rel (0) target = $region45
    $region44: #{tpu_custom_call.1} parent=1 // pred_region
      _
    $region45: #{tpu_custom_call.1} parent=1 // pred_fallthru
      _
    %433 = vsyncpa [#allocation3], 1

</llo_original>
